<compile_context>
chip_gen: v7x
topology: tpu7x:2x2x1
jax: 0.10.0
libtpu: 0.0.40
codegen_flags: <defaults>
</compile_context>

<pallas_src>
import functools

import jax
import jax.numpy as jnp
import numpy as np
from jax import lax
from jax.experimental import pallas as pl
from jax.experimental.pallas import tpu as pltpu


def _padding_for(kernel_size, dilation):
    # exact padding table from the PyTorch module (falls back to 0 like the module)
    table = {(3, 1): 1, (3, 2): 2, (5, 1): 2, (5, 2): 4, (7, 1): 3, (7, 2): 6}
    return table.get((kernel_size, dilation), 0)


def _basic_conv_kernel(a_ref, x_ref, w_ref, o_ref, *, TH, KH, dilation):
    # a_ref: (1,) PReLU alpha, in SMEM
    # x_ref: (1, Hp, Wp*Cin)  full padded image of one batch element
    #                         (block index ignores h -> stays resident across row tiles)
    # w_ref: (KH, Wp*Cin, W_out*Cout)  Toeplitz-expanded conv weight
    # o_ref: (1, TH, W_out*Cout)       lane-dense output row tile
    row0 = pl.multiple_of(pl.program_id(1) * TH, TH)
    wo = w_ref.shape[-1]

    acc = jnp.zeros((TH, wo), jnp.float32)
    # KH is small & static -> unrolled; each tap is a deep (K = Wp*Cin) MXU matmul
    # fed by a pure sublane-offset row slice (no lane relayout, no im2col copies).
    for kh in range(KH):
        rows = x_ref[0, pl.ds(row0 + kh * dilation, TH), :]     # (TH, Wp*Cin)
        acc += jnp.dot(rows, w_ref[kh], preferred_element_type=jnp.float32)

    alpha = a_ref[0]
    y = jnp.where(acc > 0, acc, alpha * acc)                    # PReLU (single alpha)
    o_ref[0] = y.astype(o_ref.dtype)


def basic_conv(x_nchw, weight_oihw, prelu_alpha, *, kernel_size=3, dilation=1):
    """BasicConv forward. x_nchw: (N, Cin, H, W); weight_oihw: (Cout, Cin, KH, KW)."""
    N, Cin, H, W = x_nchw.shape
    Cout, Cin_w, KH, KW = weight_oihw.shape
    assert Cin_w == Cin, "groups != 1 not supported"
    pad = _padding_for(kernel_size, dilation)

    Hp = H + 2 * pad
    Wp = W + 2 * pad
    H_out = Hp - dilation * (KH - 1)
    W_out = Wp - dilation * (KW - 1)

    # ---- wrapper-side layout prep (pad fuses into the transpose under XLA) ----
    x_nhwc = jnp.transpose(x_nchw, (0, 2, 3, 1))
    x_pad = jnp.pad(x_nhwc, ((0, 0), (pad, pad), (pad, pad), (0, 0)))
    x_flat = x_pad.reshape(N, Hp, Wp * Cin)

    # Toeplitz-expand the weight once:
    #   T[kh, wp, ci, w, co] = sum_kw [wp == w + kw*dilation] * weight[co, ci, kh, kw]
    wp_idx = jnp.arange(Wp)[:, None]
    w_idx = jnp.arange(W_out)[None, :]
    masks = jnp.stack(
        [(wp_idx == w_idx + kw * dilation).astype(weight_oihw.dtype) for kw in range(KW)],
        axis=0)                                                  # (KW, Wp, W_out)
    w_hkio = jnp.transpose(weight_oihw, (2, 3, 1, 0))            # (KH, KW, Cin, Cout)
    t_w = jnp.einsum("kpw,hkio->hpiwo", masks, w_hkio)           # (KH, Wp, Cin, W_out, Cout)
    t_w = t_w.reshape(KH, Wp * Cin, W_out * Cout)

    alpha = jnp.asarray(prelu_alpha, jnp.float32).reshape(1)

    # Row-tile size: multiple of 8 sublanes when possible; >= 2 tiles for megacore.
    TH = 8 if (H_out % 8 == 0 and H_out > 8) else H_out
    NH = H_out // TH

    flops = 2 * N * NH * KH * TH * (Wp * Cin) * (W_out * Cout)
    bytes_accessed = 4 * (N * Hp * Wp * Cin + KH * Wp * Cin * W_out * Cout
                          + N * H_out * W_out * Cout)

    kernel = functools.partial(_basic_conv_kernel, TH=TH, KH=KH, dilation=dilation)

    out_flat = pl.pallas_call(
        kernel,
        out_shape=jax.ShapeDtypeStruct((N, H_out, W_out * Cout), x_nchw.dtype),
        grid_spec=pltpu.PrefetchScalarGridSpec(
            num_scalar_prefetch=0,
            grid=(N, NH),
            in_specs=[
                pl.BlockSpec(memory_space=pltpu.MemorySpace.SMEM),            # alpha
                pl.BlockSpec((1, Hp, Wp * Cin), lambda n, h: (n, 0, 0)),       # input
                pl.BlockSpec((KH, Wp * Cin, W_out * Cout),
                             lambda n, h: (0, 0, 0)),                          # weight
            ],
            out_specs=pl.BlockSpec((1, TH, W_out * Cout), lambda n, h: (n, h, 0)),
        ),
        compiler_params=pltpu.CompilerParams(
            dimension_semantics=("parallel", "parallel"),
            vmem_limit_bytes=32 * 1024 * 1024),
        cost_estimate=pl.CostEstimate(
            flops=flops, transcendentals=0, bytes_accessed=bytes_accessed),
    )(alpha, x_flat, t_w)

    out_nhwc = out_flat.reshape(N, H_out, W_out, Cout)
    return jnp.transpose(out_nhwc, (0, 3, 1, 2))                 # back to NCHW


def _reference(x_nchw, weight_oihw, prelu_alpha, *, kernel_size=3, dilation=1):
    pad = _padding_for(kernel_size, dilation)
    y = lax.conv_general_dilated(
        x_nchw, weight_oihw,
        window_strides=(1, 1),
        padding=[(pad, pad), (pad, pad)],
        rhs_dilation=(dilation, dilation),
        dimension_numbers=("NCHW", "OIHW", "NCHW"))
    a = jnp.asarray(prelu_alpha, jnp.float32)
    return jnp.where(y > 0, y, a * y)


if __name__ == "__main__":
    # BasicConv(in_planes=4, out_planes=8, kernel_size=3)  (bn=False, relu=True, bias=False)
    N, Cin, H, W = 2, 4, 16, 16
    Cout, K, dil = 8, 3, 1

    key = jax.random.PRNGKey(0)
    kx, kw = jax.random.split(key)
    x = jax.random.normal(kx, (N, Cin, H, W), jnp.float32)
    weight = jax.random.normal(kw, (Cout, Cin, K, K), jnp.float32) * 0.1
    prelu_alpha = jnp.float32(0.25)  # PyTorch PReLU default init

    out = basic_conv(x, weight, prelu_alpha, kernel_size=K, dilation=dil)
    out = jax.block_until_ready(out)

    ref = _reference(x, weight, prelu_alpha, kernel_size=K, dilation=dil)
    np.testing.assert_allclose(np.asarray(out), np.asarray(ref), rtol=1e-4, atol=1e-4)

    print("KERNEL_OK")
</pallas_src>

<mosaic_0001>
module attributes {stable_mosaic.version = 11 : i64} {
  func.func @_basic_conv_kernel(%arg0: i32, %arg1: i32, %arg2: memref<1xf32, #tpu.memory_space<smem>>, %arg3: memref<1x18x72xf32, #tpu.memory_space<vmem>>, %arg4: memref<3x72x128xf32, #tpu.memory_space<vmem>>, %arg5: memref<1x8x128xf32, #tpu.memory_space<vmem>>) attributes {dimension_semantics = [#tpu.dimension_semantics<parallel>, #tpu.dimension_semantics<parallel>], iteration_bounds = array<i64: 2, 2>, scalar_prefetch = 0 : i64, scratch_operands = 0 : i64, tpu.core_type = #tpu.core_type<tc>, window_params = [{transform_indices = @transform_0, window_bounds = array<i64: 1>}, {transform_indices = @transform_1, window_bounds = array<i64: 1, 18, 72>}, {pipeline_mode = #tpu.pipeline_mode<synchronous>, transform_indices = @transform_2, window_bounds = array<i64: 3, 72, 128>}, {transform_indices = @transform_3, window_bounds = array<i64: 1, 8, 128>}]} {
    %c8_i32 = arith.constant 8 : i32
    %0 = arith.muli %arg1, %c8_i32 : i32
    %1 = tpu.assume_multiple %0, 8 : i32
    %cst = arith.constant 0.000000e+00 : f32
    %2 = vector.broadcast %cst : f32 to vector<8x128xf32>
    %c0_i32 = arith.constant 0 : i32
    %3 = arith.addi %1, %c0_i32 : i32
    %c0 = arith.constant 0 : index
    %4 = arith.index_cast %3 : i32 to index
    %c0_0 = arith.constant 0 : index
    %5 = vector.load %arg3[%c0, %4, %c0_0] : memref<1x18x72xf32, #tpu.memory_space<vmem>>, vector<1x8x72xf32>
    %6 = vector.shape_cast %5 : vector<1x8x72xf32> to vector<8x72xf32>
    %c0_1 = arith.constant 0 : index
    %c0_2 = arith.constant 0 : index
    %c0_3 = arith.constant 0 : index
    %7 = vector.load %arg4[%c0_1, %c0_2, %c0_3] : memref<3x72x128xf32, #tpu.memory_space<vmem>>, vector<1x72x128xf32>
    %8 = vector.shape_cast %7 : vector<1x72x128xf32> to vector<72x128xf32>
    %cst_4 = arith.constant dense<0.000000e+00> : vector<8x128xf32>
    %9 = tpu.matmul %6, %8, %cst_4 {dimension_numbers = #tpu.dot_dimension_numbers<[1], [0], [0], [1], [0, 0, 1, 1], [], []>} : vector<8x72xf32>, vector<72x128xf32>, vector<8x128xf32> -> vector<8x128xf32>
    %10 = arith.addf %2, %9 : vector<8x128xf32>
    %c1_i32 = arith.constant 1 : i32
    %11 = arith.addi %1, %c1_i32 : i32
    %c0_5 = arith.constant 0 : index
    %12 = arith.index_cast %11 : i32 to index
    %c0_6 = arith.constant 0 : index
    %13 = vector.load %arg3[%c0_5, %12, %c0_6] : memref<1x18x72xf32, #tpu.memory_space<vmem>>, vector<1x8x72xf32>
    %14 = vector.shape_cast %13 : vector<1x8x72xf32> to vector<8x72xf32>
    %c1 = arith.constant 1 : index
    %c0_7 = arith.constant 0 : index
    %c0_8 = arith.constant 0 : index
    %15 = vector.load %arg4[%c1, %c0_7, %c0_8] : memref<3x72x128xf32, #tpu.memory_space<vmem>>, vector<1x72x128xf32>
    %16 = vector.shape_cast %15 : vector<1x72x128xf32> to vector<72x128xf32>
    %cst_9 = arith.constant dense<0.000000e+00> : vector<8x128xf32>
    %17 = tpu.matmul %14, %16, %cst_9 {dimension_numbers = #tpu.dot_dimension_numbers<[1], [0], [0], [1], [0, 0, 1, 1], [], []>} : vector<8x72xf32>, vector<72x128xf32>, vector<8x128xf32> -> vector<8x128xf32>
    %18 = arith.addf %10, %17 : vector<8x128xf32>
    %c2_i32 = arith.constant 2 : i32
    %19 = arith.addi %1, %c2_i32 : i32
    %c0_10 = arith.constant 0 : index
    %20 = arith.index_cast %19 : i32 to index
    %c0_11 = arith.constant 0 : index
    %21 = vector.load %arg3[%c0_10, %20, %c0_11] : memref<1x18x72xf32, #tpu.memory_space<vmem>>, vector<1x8x72xf32>
    %22 = vector.shape_cast %21 : vector<1x8x72xf32> to vector<8x72xf32>
    %c2 = arith.constant 2 : index
    %c0_12 = arith.constant 0 : index
    %c0_13 = arith.constant 0 : index
    %23 = vector.load %arg4[%c2, %c0_12, %c0_13] : memref<3x72x128xf32, #tpu.memory_space<vmem>>, vector<1x72x128xf32>
    %24 = vector.shape_cast %23 : vector<1x72x128xf32> to vector<72x128xf32>
    %cst_14 = arith.constant dense<0.000000e+00> : vector<8x128xf32>
    %25 = tpu.matmul %22, %24, %cst_14 {dimension_numbers = #tpu.dot_dimension_numbers<[1], [0], [0], [1], [0, 0, 1, 1], [], []>} : vector<8x72xf32>, vector<72x128xf32>, vector<8x128xf32> -> vector<8x128xf32>
    %26 = arith.addf %18, %25 : vector<8x128xf32>
    %c0_15 = arith.constant 0 : index
    %27 = memref.load %arg2[%c0_15] : memref<1xf32, #tpu.memory_space<smem>>
    %cst_16 = arith.constant 0.000000e+00 : f32
    %28 = vector.broadcast %cst_16 : f32 to vector<8x128xf32>
    %29 = arith.cmpf ogt, %26, %28 : vector<8x128xf32>
    %30 = vector.broadcast %27 : f32 to vector<8x128xf32>
    %31 = arith.mulf %30, %26 : vector<8x128xf32>
    %32 = arith.select %29, %26, %31 : vector<8x128xi1>, vector<8x128xf32>
    %c0_17 = arith.constant 0 : index
    %c0_18 = arith.constant 0 : index
    %c0_19 = arith.constant 0 : index
    %33 = vector.load %arg5[%c0_17, %c0_18, %c0_19] : memref<1x8x128xf32, #tpu.memory_space<vmem>>, vector<1x8x128xf32>
    %34 = vector.shape_cast %33 : vector<1x8x128xf32> to vector<8x128xf32>
    %35 = vector.shape_cast %32 : vector<8x128xf32> to vector<1x8x128xf32>
    tpu.vector_store %arg5[%c0_17, %c0_18, %c0_19], %35 {strides = array<i32>} : memref<1x8x128xf32, #tpu.memory_space<vmem>>, vector<1x8x128xf32>,
    return
  }
  func.func @transform_0(%arg0: i32, %arg1: i32) -> i32 {
    %c0_i32 = arith.constant 0 : i32
    %c0_i32_0 = arith.constant 0 : i32
    return %c0_i32 : i32
  }
  func.func @transform_1(%arg0: i32, %arg1: i32) -> (i32, i32, i32) {
    %c0_i32 = arith.constant 0 : i32
    %c0_i32_0 = arith.constant 0 : i32
    %c0_i32_1 = arith.constant 0 : i32
    return %arg0, %c0_i32, %c0_i32_0 : i32, i32, i32
  }
  func.func @transform_2(%arg0: i32, %arg1: i32) -> (i32, i32, i32) {
    %c0_i32 = arith.constant 0 : i32
    %c0_i32_0 = arith.constant 0 : i32
    %c0_i32_1 = arith.constant 0 : i32
    %c0_i32_2 = arith.constant 0 : i32
    return %c0_i32, %c0_i32_0, %c0_i32_1 : i32, i32, i32
  }
  func.func @transform_3(%arg0: i32, %arg1: i32) -> (i32, i32, i32) {
    %c0_i32 = arith.constant 0 : i32
    %c0_i32_0 = arith.constant 0 : i32
    return %arg0, %arg1, %c0_i32 : i32, i32, i32
  }
}

</mosaic_0001>

<llo_original>
// kernel: tpu_custom_call.1
$region0: #{tpu_custom_call.1}
  #allocation0 [shape = 'u32[]', space=smem, size = 0x4, offset = 0x4, fixed_abs, tag = 'smem constant byte address 0x4 - core index']
  #allocation1 [shape = 'u32[144,128]{1,0:T(1,128)}', space=vmem, size = 0x12000, scoped, tag = 'internal scratch']
  #allocation2 [shape = 'f32[1]{0:T(128)S(6)}', space=smem, size = 0x200, scoped, tag = 'scoped memory for tpu_custom_call.1']
  %s0 = inlined_call_operand.<no memory space> [shape: f32[1], index: 0, kind: input, shape index: {}]
  %s1 = inlined_call_operand.vmem [shape: f32[2,18,72], index: 1, kind: input, shape index: {}]
  %s2 = inlined_call_operand.hbm [shape: f32[3,72,128], index: 2, kind: input, shape index: {}]
  %s3 = inlined_call_operand.hbm [shape: f32[2,16,128], index: 3, kind: output, shape index: {}]
  %s4 = sld [smem:[#allocation0]]
  $region49: #{tpu_custom_call.1} parent=0
    _
  %s6 = ssub.s32 1, %s4
  %s7 = scalar_select 0, %s6, %s4
  %8 = sst [smem:[#allocation2]] %s0
  $region1: #{tpu_custom_call.1} parent=0
    #allocation3 [shape = 'u8[110592]{0}', space=vmem, size = 0x1b000, scoped, tag = 'input window, operand 2, single buffered']
    #allocation4 [shape = 's32[2]{0}', space=sflag, size = 0x8, scoped, tag = 'scoped memory for tpu_custom_call.1']
    #allocation5 [shape = 's32[2]{0}', space=sflag, size = 0x8, scoped, tag = 'scoped memory for tpu_custom_call.1']
    #allocation6 [shape = 'u8[8192]{0}', space=vmem, size = 0x2000, scoped, tag = 'output window, operand 0']
    %9 = vsyncpa [#allocation4], 0
    %10 = vsyncpa [#allocation5], 0
    %s11 = scalar_lea.sflag [#allocation5], 1
    %12 = vsyncpa %s11, 0
    loop: start=0, step=1, limit=6
    $region2: #{tpu_custom_call.1} parent=1 // loop_pre_header
      _
    $region3: #{tpu_custom_call.1} parent=1 // loop_header
      %s14 = sphi 0, %s18
      %p15 = scmp.ge.s32.totalorder %s14, 6
      %s21 = sphi 0, %s33
      %s22 = sphi 0, %s29
      %s23 = sphi 0, %s21
      %s24 = sphi 0, %s22
      %s25 = sphi 0, %s23
      %s26 = sphi 0, %s24
      %s34 = sphi 0, %s34
      %s36 = sphi 0, %s34
      %s37 = sphi 0, %s36
      %s51 = sphi 0, %s37
      %s57 = sphi 0, %s59
      %s60 = sphi 0, %s57
      %s61 = sphi 0, %s60
      %s77 = sphi 0, %s61
      %s81 = sphi 0, %s81
      %s83 = sphi 0, %s81
      %s84 = sphi 0, %s83
      %s98 = sphi 0, %s84
      %s106 = sphi 0, %s108
      %s109 = sphi 0, %s106
      %s110 = sphi 0, %s109
      %s126 = sphi 0, %s110
    $region4: #{tpu_custom_call.1} parent=1 // loop_header_branch
      %17 = sbr.rel (%p15) target = $region8
    $region5: #{tpu_custom_call.1} parent=1 // loop_body
      %s19 = ssub.s32 %s14, 1
      %s20 = ssub.s32 %s14, 2
      %s27 = sadd.s32 1, %s22
      %p28 = scmp.ge.s32.totalorder %s27, 2
      %s29 = scalar_select %p28, 0, %s27
      %s30 = sadd.s32 1, %s21
      %s31 = scalar_select %p28, %s30, %s21
      %p32 = scmp.ge.s32.totalorder %s31, 2
      %s33 = scalar_select %p32, 0, %s31
      %s35 = sadd.s32 %s34, 1
      %p38 = scmp.eq.s32.totalorder %s14, 3
      %p39 = scmp.ne.s32.totalorder %s34, %s36
      %p40 = scmp.eq.s32.totalorder %s14, 0
      %p41 = por %p39, %p40
      %p42 = scmp.ne.s32.totalorder %s34, %s36
      %p43 = scmp.eq.s32.totalorder %s19, 3
      %p44 = por %p42, %p43
      %p45 = scmp.ne.s32.totalorder %s36, %s37
      %p46 = scmp.eq.s32.totalorder %s19, 0
      %p47 = por %p45, %p46
      %p48 = scmp.ne.s32.totalorder %s36, %s37
      %p49 = scmp.eq.s32.totalorder %s20, 3
      %p50 = por %p48, %p49
      %p52 = scmp.ne.s32.totalorder %s37, %s51
      %p53 = scmp.eq.s32.totalorder %s20, 0
      %p54 = por %p52, %p53
      %s55 = ssub.s32 %s21, %s33
      %p56 = scmp.eq.s32.totalorder %s55, 0
      %s58 = sadd.s32 %s57, 1
      %s59 = scalar_select %p56, %s57, %s58
      %p62 = pneg %p56
      %p63 = scmp.eq.s32.totalorder %s14, 3
      %p64 = por %p62, %p63
      %p65 = scmp.ne.s32.totalorder %s57, %s60
      %p66 = scmp.eq.s32.totalorder %s14, 0
      %p67 = por %p65, %p66
      %p68 = scmp.ne.s32.totalorder %s57, %s60
      %p69 = scmp.eq.s32.totalorder %s19, 3
      %p70 = por %p68, %p69
      %p71 = scmp.ne.s32.totalorder %s60, %s61
      %p72 = scmp.eq.s32.totalorder %s19, 0
      %p73 = por %p71, %p72
      %p74 = scmp.ne.s32.totalorder %s60, %s61
      %p75 = scmp.eq.s32.totalorder %s20, 3
      %p76 = por %p74, %p75
      %p78 = scmp.ne.s32.totalorder %s61, %s77
      %p79 = scmp.eq.s32.totalorder %s20, 0
      %p80 = por %p78, %p79
      %s82 = sadd.s32 %s81, 1
      %p85 = scmp.eq.s32.totalorder %s14, 3
      %p86 = scmp.ne.s32.totalorder %s81, %s83
      %p87 = scmp.eq.s32.totalorder %s14, 0
      %p88 = por %p86, %p87
      %p89 = scmp.ne.s32.totalorder %s81, %s83
      %p90 = scmp.eq.s32.totalorder %s19, 3
      %p91 = por %p89, %p90
      %p92 = scmp.ne.s32.totalorder %s83, %s84
      %p93 = scmp.eq.s32.totalorder %s19, 0
      %p94 = por %p92, %p93
      %p95 = scmp.ne.s32.totalorder %s83, %s84
      %p96 = scmp.eq.s32.totalorder %s20, 3
      %p97 = por %p95, %p96
      %p99 = scmp.ne.s32.totalorder %s84, %s98
      %p100 = scmp.eq.s32.totalorder %s20, 0
      %p101 = por %p99, %p100
      %s102 = ssub.s32 %s21, %s33
      %s103 = ssub.s32 %s22, %s29
      %s104 = sor.u32 %s102, %s103
      %p105 = scmp.eq.s32.totalorder %s104, 0
      %s107 = sadd.s32 %s106, 1
      %s108 = scalar_select %p105, %s106, %s107
      %p111 = pneg %p105
      %p112 = scmp.eq.s32.totalorder %s14, 3
      %p113 = por %p111, %p112
      %p114 = scmp.ne.s32.totalorder %s106, %s109
      %p115 = scmp.eq.s32.totalorder %s14, 0
      %p116 = por %p114, %p115
      %p117 = scmp.ne.s32.totalorder %s106, %s109
      %p118 = scmp.eq.s32.totalorder %s19, 3
      %p119 = por %p117, %p118
      %p120 = scmp.ne.s32.totalorder %s109, %s110
      %p121 = scmp.eq.s32.totalorder %s19, 0
      %p122 = por %p120, %p121
      %p123 = scmp.ne.s32.totalorder %s109, %s110
      %p124 = scmp.eq.s32.totalorder %s20, 3
      %p125 = por %p123, %p124
      %p127 = scmp.ne.s32.totalorder %s110, %s126
      %p128 = scmp.eq.s32.totalorder %s20, 0
      %p129 = por %p127, %p128
      %p130 = scmp.le.s32.totalorder 1, %s14
      %p131 = scmp.lt.s32.totalorder %s14, 5
      %p132 = pnand %p130, %p131
      %p133 = pneg %p132
      // Predicated region
      $region9: #{tpu_custom_call.1} parent=5 // pred_check
        _
      $region10: #{tpu_custom_call.1} parent=5 // pred_check_branch
        %135 = sbr.rel (%p132) target = $region12
      $region11: #{tpu_custom_call.1} parent=5 // pred_region
        %s136 = ssub.s32 %s14, 1
        // Predicated region
        $region13: #{tpu_custom_call.1} parent=11 // pred_check
          %p137 = pneg %p47
        $region14: #{tpu_custom_call.1} parent=11 // pred_check_branch
          %139 = sbr.rel (%p137) target = $region16
        $region15: #{tpu_custom_call.1} parent=11 // pred_region
          _
        $region16: #{tpu_custom_call.1} parent=11 // pred_fallthru
          _
        // Predicated region
        $region17: #{tpu_custom_call.1} parent=11 // pred_check
          %p140 = pneg %p94
        $region18: #{tpu_custom_call.1} parent=11 // pred_check_branch
          %142 = sbr.rel (%p140) target = $region20
        $region19: #{tpu_custom_call.1} parent=11 // pred_region
          %s144 = ssub.s32 3456, 3456
          %145 = vsyncadd [#allocation4], %s144
          %s146 = sshll.u32 [#allocation3], 4
          %s147 = int_to_ptr.vmem [resolvable:$true] %s146
          %152 = dma.hbm_to_vmem [thread:$0]  %s2, 3456, %s147, [#allocation4], 128, 128, 8
        $region20: #{tpu_custom_call.1} parent=11 // pred_fallthru
          _
      $region12: #{tpu_custom_call.1} parent=5 // pred_fallthru
        _
      %p153 = scmp.lt.s32.totalorder %s14, 4
      // Predicated region
      $region21: #{tpu_custom_call.1} parent=5 // pred_check
        %p154 = pneg %p153
      $region22: #{tpu_custom_call.1} parent=5 // pred_check_branch
        %156 = sbr.rel (%p154) target = $region24
      $region23: #{tpu_custom_call.1} parent=5 // pred_region
        // Predicated region
        $region25: #{tpu_custom_call.1} parent=23 // pred_check
          %p157 = pneg %p67
        $region26: #{tpu_custom_call.1} parent=23 // pred_check_branch
          %159 = sbr.rel (%p157) target = $region28
        $region27: #{tpu_custom_call.1} parent=23 // pred_region
          %p160 = scmp.lt.s32.totalorder %s21, 1
          %s161 = scalar_select %p160, %s21, 1
          %s162 = smul.addr %s161, 3
          %s163 = smul.addr %s162, 8
          %s164 = scalar_lea.vmem %s1, %s163
        $region28: #{tpu_custom_call.1} parent=23 // pred_fallthru
          _
      $region24: #{tpu_custom_call.1} parent=5 // pred_fallthru
        _
      %p165 = scmp.le.s32.totalorder 1, %s14
      %p166 = scmp.lt.s32.totalorder %s14, 5
      %p167 = pnand %p165, %p166
      %p168 = pneg %p167
      // Predicated region
      $region29: #{tpu_custom_call.1} parent=5 // pred_check
        _
      $region30: #{tpu_custom_call.1} parent=5 // pred_check_branch
        %170 = sbr.rel (%p167) target = $region32
      $region31: #{tpu_custom_call.1} parent=5 // pred_region
        %s171 = ssub.s32 %s14, 1
        // Predicated region
        $region33: #{tpu_custom_call.1} parent=31 // pred_check
          %p172 = pneg %p94
        $region34: #{tpu_custom_call.1} parent=31 // pred_check_branch
          %174 = sbr.rel (%p172) target = $region36
        $region35: #{tpu_custom_call.1} parent=31 // pred_region
          %175 = dma.done [#allocation4], 3456
        $region36: #{tpu_custom_call.1} parent=31 // pred_fallthru
          _
        %p176 = pneg %p47
        %p177 = pneg %p44
        %p178 = scmp.lt.s32.totalorder %s23, 1
        %s179 = scalar_select %p178, %s23, 1
        %s180 = smul.addr %s179, 3
        %s181 = smul.addr %s180, 8
        %s182 = scalar_lea.vmem %s1, %s181
        %p183 = pneg %p73
        %p184 = pneg %p70
        %p185 = pneg %p94
        %p186 = pneg %p91
        %p187 = pneg %p122
        %p188 = pneg %p119
        %s189 = sand.u32 %s109, 1
        %s190 = scalar_lea.sflag [#allocation5], %s189
        %s191 = sand.u32 %s109, 1
        %s192 = smul.addr %s191, 8
        %s193 = scalar_lea.vmem [#allocation6], %s192
        %p194 = scmp.lt.s32.totalorder %s23, 1
        %s195 = scalar_select %p194, %s23, 1
        %s196 = smul.addr %s195, 3
        %s197 = smul.addr %s196, 8
        %s198 = scalar_lea.vmem %s1, %s197
        %s199 = smul.u32 %s24, 8
        %s200 = scalar_lea.vmem %s198, %s199
        %v201 = vld [vmem:[%s200] sm:$0xff]
        %v202 = vld [vmem:[#allocation3] sm:$0xff]
        %v203 = vld [vmem:[#allocation3 + $0x8] sm:$0xff]
        %v204 = vld [vmem:[#allocation3 + $0x10] sm:$0xff]
        %v205 = vld [vmem:[#allocation3 + $0x18] sm:$0xff]
        %v206 = vld [vmem:[#allocation3 + $0x20] sm:$0xff]
        %v207 = vld [vmem:[#allocation3 + $0x28] sm:$0xff]
        %v208 = vld [vmem:[#allocation3 + $0x30] sm:$0xff]
        %v209 = vld [vmem:[#allocation3 + $0x38] sm:$0xff]
        %v210 = vld [vmem:[#allocation3 + $0x40] sm:$0xff]
        %s211 = sadd.s32 %s199, 1
        %s212 = scalar_lea.vmem %s198, %s211
        %v213 = vld [vmem:[%s212] sm:$0xff]
        %s214 = scalar_lea.vmem [#allocation3], 72
        %v215 = vld [vmem:[%s214] sm:$0xff]
        %v216 = vld [vmem:[%s214 + $0x8] sm:$0xff]
        %v217 = vld [vmem:[%s214 + $0x10] sm:$0xff]
        %v218 = vld [vmem:[%s214 + $0x18] sm:$0xff]
        %v219 = vld [vmem:[%s214 + $0x20] sm:$0xff]
        %v220 = vld [vmem:[%s214 + $0x28] sm:$0xff]
        %v221 = vld [vmem:[%s214 + $0x30] sm:$0xff]
        %v222 = vld [vmem:[%s214 + $0x38] sm:$0xff]
        %v223 = vld [vmem:[%s214 + $0x40] sm:$0xff]
        %vm224 = vcmask 588800
        %v226 = vsel %vm224, %v213, 0
        %228 = vmatprep.subr.mxu0 0.0
        %229 = vmatpush1.msra.mxu0 %v215
        %230 = vmatprep.subr.mxu0 0.0
        %231 = vmatpush1.msra.mxu0 %v216
        %232 = vmatprep.subr.mxu0 0.0
        %233 = vmatpush1.msra.mxu0 %v217
        %234 = vmatprep.subr.mxu0 0.0
        %235 = vmatpush1.msra.mxu0 %v218
        %236 = vmatprep.subr.mxu0 0.0
        %237 = vmatpush1.msra.mxu0 %v219
        %238 = vmatprep.subr.mxu0 0.0
        %239 = vmatpush1.msra.mxu0 %v220
        %240 = vmatprep.subr.mxu0 0.0
        %241 = vmatpush1.msra.mxu0 %v221
        %242 = vmatprep.subr.mxu0 0.0
        %243 = vmatpush1.msra.mxu0 %v222
        %244 = vmatprep.subr.mxu0 0.0
        %245 = vmatpush1.msra.mxu0 %v223
        %246 = vmatprep.subr.mxu0 0.0
        %247 = vmatpush1.msra.mxu0 0.0
        %248 = vmatprep.subr.mxu0 0.0
        %249 = vmatpush1.msra.mxu0 0.0
        %250 = vmatprep.subr.mxu0 0.0
        %251 = vmatpush1.msra.mxu0 0.0
        %252 = vmatprep.subr.mxu0 0.0
        %253 = vmatpush1.msra.mxu0 0.0
        %254 = vmatprep.subr.mxu0 0.0
        %255 = vmatpush1.msra.mxu0 0.0
        %256 = vmatprep.subr.mxu0 0.0
        %257 = vmatpush1.msra.mxu0 0.0
        %258 = vmatprep.subr.mxu0 0.0
        %259 = vmatpush1.msra.mxu0 0.0
        %260 = vmatprep.subr.mxu0 0.0
        %261 = vmatpush1.msra.mxu0 0.0
        %262 = vmatprep.subr.mxu0 0.0
        %263 = vmatpush1.msra.mxu0 0.0
        %264 = vmatprep.subr.mxu0 0.0
        %265 = vmatpush1.msra.mxu0 0.0
        %266 = vmatprep.subr.mxu0 0.0
        %267 = vmatpush1.msra.mxu0 0.0
        %268 = vmatprep.subr.mxu0 0.0
        %269 = vmatpush1.msra.mxu0 0.0
        %270 = vmatprep.subr.mxu0 0.0
        %271 = vmatpush1.msra.mxu0 0.0
        %272 = vmatprep.subr.mxu0 0.0
        %273 = vmatpush1.msra.mxu0 0.0
        %274 = vmatprep.subr.mxu0 0.0
        %275 = vmatpush1.msra.mxu0 0.0
        %276 = vmatprep.subr.mxu0 0.0
        %277 = vmatpush1.msra.mxu0 0.0
        %278 = vmatprep.subr.mxu0 0.0
        %279 = vmatpush1.msra.mxu0 0.0
        %280 = vmatprep.subr.mxu0 0.0
        %281 = vmatpush1.msra.mxu0 0.0
        %282 = vmatprep.subr.mxu0 0.0
        %283 = vmatpush1.msra.mxu0 0.0
        %284 = vmatprep.subr.mxu0 0.0
        %285 = vmatpush1.msra.mxu0 0.0
        %286 = vmatprep.subr.mxu0 0.0
        %287 = vmatpush1.msra.mxu0 0.0
        %288 = vmatprep.subr.mxu0 0.0
        %289 = vmatpush1.msra.mxu0 0.0
        %290 = vmatprep.subr.mxu0 0.0
        %291 = vmatpush1.msra.mxu0 0.0
        %292 = vmatprep.mubr.f32.mxu0 0.0
        %293 = vmatmul.mubr.f32.gmra.mrb[0].mxu0 %v226
        %v294 = vpop.f32.mrb[0].mxu0
        %v295 = vadd.f32 0.0, %v294
        %v296 = vpop.f32.mrb[0].mxu0
        %297 = vdwg.mxu0
        %v299 = vsel %vm224, %v201, 0
        %301 = vmatprep.subr.mxu0 0.0
        %302 = vmatpush1.msra.mxu0 %v202
        %303 = vmatprep.subr.mxu0 0.0
        %304 = vmatpush1.msra.mxu0 %v203
        %305 = vmatprep.subr.mxu0 0.0
        %306 = vmatpush1.msra.mxu0 %v204
        %307 = vmatprep.subr.mxu0 0.0
        %308 = vmatpush1.msra.mxu0 %v205
        %309 = vmatprep.subr.mxu0 0.0
        %310 = vmatpush1.msra.mxu0 %v206
        %311 = vmatprep.subr.mxu0 0.0
        %312 = vmatpush1.msra.mxu0 %v207
        %313 = vmatprep.subr.mxu0 0.0
        %314 = vmatpush1.msra.mxu0 %v208
        %315 = vmatprep.subr.mxu0 0.0
        %316 = vmatpush1.msra.mxu0 %v209
        %317 = vmatprep.subr.mxu0 0.0
        %318 = vmatpush1.msra.mxu0 %v210
        %319 = vmatprep.subr.mxu0 0.0
        %320 = vmatpush1.msra.mxu0 0.0
        %321 = vmatprep.subr.mxu0 0.0
        %322 = vmatpush1.msra.mxu0 0.0
        %323 = vmatprep.subr.mxu0 0.0
        %324 = vmatpush1.msra.mxu0 0.0
        %325 = vmatprep.subr.mxu0 0.0
        %326 = vmatpush1.msra.mxu0 0.0
        %327 = vmatprep.subr.mxu0 0.0
        %328 = vmatpush1.msra.mxu0 0.0
        %329 = vmatprep.subr.mxu0 0.0
        %330 = vmatpush1.msra.mxu0 0.0
        %331 = vmatprep.subr.mxu0 0.0
        %332 = vmatpush1.msra.mxu0 0.0
        %333 = vmatprep.subr.mxu0 0.0
        %334 = vmatpush1.msra.mxu0 0.0
        %335 = vmatprep.subr.mxu0 0.0
        %336 = vmatpush1.msra.mxu0 0.0
        %337 = vmatprep.subr.mxu0 0.0
        %338 = vmatpush1.msra.mxu0 0.0
        %339 = vmatprep.subr.mxu0 0.0
        %340 = vmatpush1.msra.mxu0 0.0
        %341 = vmatprep.subr.mxu0 0.0
        %342 = vmatpush1.msra.mxu0 0.0
        %343 = vmatprep.subr.mxu0 0.0
        %344 = vmatpush1.msra.mxu0 0.0
        %345 = vmatprep.subr.mxu0 0.0
        %346 = vmatpush1.msra.mxu0 0.0
        %347 = vmatprep.subr.mxu0 0.0
        %348 = vmatpush1.msra.mxu0 0.0
        %349 = vmatprep.subr.mxu0 0.0
        %350 = vmatpush1.msra.mxu0 0.0
        %351 = vmatprep.subr.mxu0 0.0
        %352 = vmatpush1.msra.mxu0 0.0
        %353 = vmatprep.subr.mxu0 0.0
        %354 = vmatpush1.msra.mxu0 0.0
        %355 = vmatprep.subr.mxu0 0.0
        %356 = vmatpush1.msra.mxu0 0.0
        %357 = vmatprep.subr.mxu0 0.0
        %358 = vmatpush1.msra.mxu0 0.0
        %359 = vmatprep.subr.mxu0 0.0
        %360 = vmatpush1.msra.mxu0 0.0
        %361 = vmatprep.subr.mxu0 0.0
        %362 = vmatpush1.msra.mxu0 0.0
        %363 = vmatprep.subr.mxu0 0.0
        %364 = vmatpush1.msra.mxu0 0.0
        %365 = vmatprep.mubr.f32.mxu0 0.0
        %366 = vmatmul.mubr.f32.gmra.mrb[0].mxu0 %v299
        %v367 = vpop.f32.mrb[0].mxu0
        %v368 = vadd.f32 %v295, %v367
        %v369 = vpop.f32.mrb[0].mxu0
        %370 = vdwg.mxu0
        %s371 = sadd.s32 %s199, 2
        %s372 = scalar_lea.vmem %s198, %s371
        %v373 = vld [vmem:[%s372] sm:$0xff]
        %s374 = scalar_lea.vmem [#allocation3], 144
        %v375 = vld [vmem:[%s374] sm:$0xff]
        %v376 = vld [vmem:[%s374 + $0x8] sm:$0xff]
        %v377 = vld [vmem:[%s374 + $0x10] sm:$0xff]
        %v378 = vld [vmem:[%s374 + $0x18] sm:$0xff]
        %v379 = vld [vmem:[%s374 + $0x20] sm:$0xff]
        %v380 = vld [vmem:[%s374 + $0x28] sm:$0xff]
        %v381 = vld [vmem:[%s374 + $0x30] sm:$0xff]
        %v382 = vld [vmem:[%s374 + $0x38] sm:$0xff]
        %v383 = vld [vmem:[%s374 + $0x40] sm:$0xff]
        %v385 = vsel %vm224, %v373, 0
        %387 = vmatprep.subr.mxu0 0.0
        %388 = vmatpush1.msra.mxu0 %v375
        %389 = vmatprep.subr.mxu0 0.0
        %390 = vmatpush1.msra.mxu0 %v376
        %391 = vmatprep.subr.mxu0 0.0
        %392 = vmatpush1.msra.mxu0 %v377
        %393 = vmatprep.subr.mxu0 0.0
        %394 = vmatpush1.msra.mxu0 %v378
        %395 = vmatprep.subr.mxu0 0.0
        %396 = vmatpush1.msra.mxu0 %v379
        %397 = vmatprep.subr.mxu0 0.0
        %398 = vmatpush1.msra.mxu0 %v380
        %399 = vmatprep.subr.mxu0 0.0
        %400 = vmatpush1.msra.mxu0 %v381
        %401 = vmatprep.subr.mxu0 0.0
        %402 = vmatpush1.msra.mxu0 %v382
        %403 = vmatprep.subr.mxu0 0.0
        %404 = vmatpush1.msra.mxu0 %v383
        %405 = vmatprep.subr.mxu0 0.0
        %406 = vmatpush1.msra.mxu0 0.0
        %407 = vmatprep.subr.mxu0 0.0
        %408 = vmatpush1.msra.mxu0 0.0
        %409 = vmatprep.subr.mxu0 0.0
        %410 = vmatpush1.msra.mxu0 0.0
        %411 = vmatprep.subr.mxu0 0.0
        %412 = vmatpush1.msra.mxu0 0.0
        %413 = vmatprep.subr.mxu0 0.0
        %414 = vmatpush1.msra.mxu0 0.0
        %415 = vmatprep.subr.mxu0 0.0
        %416 = vmatpush1.msra.mxu0 0.0
        %417 = vmatprep.subr.mxu0 0.0
        %418 = vmatpush1.msra.mxu0 0.0
        %419 = vmatprep.subr.mxu0 0.0
        %420 = vmatpush1.msra.mxu0 0.0
        %421 = vmatprep.subr.mxu0 0.0
        %422 = vmatpush1.msra.mxu0 0.0
        %423 = vmatprep.subr.mxu0 0.0
        %424 = vmatpush1.msra.mxu0 0.0
        %425 = vmatprep.subr.mxu0 0.0
        %426 = vmatpush1.msra.mxu0 0.0
        %427 = vmatprep.subr.mxu0 0.0
        %428 = vmatpush1.msra.mxu0 0.0
        %429 = vmatprep.subr.mxu0 0.0
        %430 = vmatpush1.msra.mxu0 0.0
        %431 = vmatprep.subr.mxu0 0.0
        %432 = vmatpush1.msra.mxu0 0.0
        %433 = vmatprep.subr.mxu0 0.0
        %434 = vmatpush1.msra.mxu0 0.0
        %435 = vmatprep.subr.mxu0 0.0
        %436 = vmatpush1.msra.mxu0 0.0
        %437 = vmatprep.subr.mxu0 0.0
        %438 = vmatpush1.msra.mxu0 0.0
        %439 = vmatprep.subr.mxu0 0.0
        %440 = vmatpush1.msra.mxu0 0.0
        %441 = vmatprep.subr.mxu0 0.0
        %442 = vmatpush1.msra.mxu0 0.0
        %443 = vmatprep.subr.mxu0 0.0
        %444 = vmatpush1.msra.mxu0 0.0
        %445 = vmatprep.subr.mxu0 0.0
        %446 = vmatpush1.msra.mxu0 0.0
        %447 = vmatprep.subr.mxu0 0.0
        %448 = vmatpush1.msra.mxu0 0.0
        %449 = vmatprep.subr.mxu0 0.0
        %450 = vmatpush1.msra.mxu0 0.0
        %451 = vmatprep.mubr.f32.mxu0 0.0
        %452 = vmatmul.mubr.f32.gmra.mrb[0].mxu0 %v385
        %v453 = vpop.f32.mrb[0].mxu0
        %v454 = vadd.f32 0.0, %v453
        %v455 = vpop.f32.mrb[0].mxu0
        %456 = vdwg.mxu0
        %v457 = vadd.f32 %v368, %v454
        %s458 = sld [smem:[#allocation2]]
        %vm459 = vcmp.gt.f32.partialorder %v457, 0.0
        %v460 = vstv %s458
        %v461 = vmul.f32 %v460, %v457
        %v462 = vsel %vm459, %v457, %v461
        %463 = vst [vmem:[%s193] sm:$0xff] %v462
        %s464 = sand.u32 %s109, 1
        %s465 = scalar_lea.sflag [#allocation5], %s464
        %s466 = sand.u32 %s109, 1
        %s467 = smul.addr %s466, 8
        %s468 = scalar_lea.vmem [#allocation6], %s467
        // Predicated region
        $region37: #{tpu_custom_call.1} parent=31 // pred_check
          %p469 = pneg %p119
        $region38: #{tpu_custom_call.1} parent=31 // pred_check_branch
          %471 = sbr.rel (%p469) target = $region40
        $region39: #{tpu_custom_call.1} parent=31 // pred_region
          %s473 = ssub.s32 128, 128
          %474 = vsyncadd %s465, %s473
          %s475 = smul.addr %s23, 2
          %s476 = sadd.s32 %s24, %s475
          %s477 = smul.addr %s476, 128
          %s478 = scalar_lea.hbm %s3, %s477
          %s480 = sshll.u32 %s468, 4
          %s481 = int_to_ptr.vmem [resolvable:$true] %s480
          %483 = dma.vmem_to_hbm [thread:$0]  %s481, 128, %s478, %s465
        $region40: #{tpu_custom_call.1} parent=31 // pred_fallthru
          _
      $region32: #{tpu_custom_call.1} parent=5 // pred_fallthru
        _
      %p484 = scmp.le.s32.totalorder 2, %s14
      // Predicated region
      $region41: #{tpu_custom_call.1} parent=5 // pred_check
        %p485 = pneg %p484
      $region42: #{tpu_custom_call.1} parent=5 // pred_check_branch
        %487 = sbr.rel (%p485) target = $region44
      $region43: #{tpu_custom_call.1} parent=5 // pred_region
        %s488 = ssub.s32 %s14, 2
        // Predicated region
        $region45: #{tpu_custom_call.1} parent=43 // pred_check
          %p489 = pneg %p125
        $region46: #{tpu_custom_call.1} parent=43 // pred_check_branch
          %491 = sbr.rel (%p489) target = $region48
        $region47: #{tpu_custom_call.1} parent=43 // pred_region
          %s492 = sand.u32 %s110, 1
          %s493 = scalar_lea.sflag [#allocation5], %s492
          %s494 = sand.u32 %s110, 1
          %s495 = smul.addr %s494, 8
          %s496 = scalar_lea.vmem [#allocation6], %s495
          %497 = dma.done %s493, 128
        $region48: #{tpu_custom_call.1} parent=43 // pred_fallthru
          _
      $region44: #{tpu_custom_call.1} parent=5 // pred_fallthru
        _
    $region6: #{tpu_custom_call.1} parent=1 // loop_footer
      %s18 = sadd.s32 1, %s14
    $region7: #{tpu_custom_call.1} parent=1 // loop_footer_branch
      %13 = sbr.rel target = $region3
    $region8: #{tpu_custom_call.1} parent=1 // loop_exit
      _
    %498 = vsyncpa [#allocation4], 1
    %s499 = scalar_lea.sflag [#allocation4], 1
    %500 = vsyncpa %s499, 1
    %501 = vsyncpa [#allocation5], 1
    %s502 = scalar_lea.sflag [#allocation5], 1
    %503 = vsyncpa %s502, 1

</llo_original>
